<compile_context>
chip_gen: v6e
topology: v6e:2x2x1
jax: 0.10.0
libtpu: 0.0.40
codegen_flags: <defaults>
</compile_context>

<pallas_src>
import functools
import math

import jax
import jax.numpy as jnp
from jax.experimental import pallas as pl
from jax.experimental.pallas import tpu as pltpu

_GELU_C = math.sqrt(2.0 / math.pi)


def _gelu(x):
    # tanh-approximation GELU (matches the book's custom GELU module)
    return 0.5 * x * (1.0 + jnp.tanh(_GELU_C * (x + 0.044715 * x * x * x)))


def _fused_mlp_kernel(x_ref, *refs, add_residual):
    """Fused forward: chains all layers, keeping activations in vregs.

    refs = (w0, b0, w1, b1, ..., w{L-1}, b{L-1}, o_ref)
    add_residual: static tuple of bools, one per layer (baked at trace time,
    mirroring the PyTorch shape check which is static for fixed layer sizes).
    """
    o_ref = refs[-1]
    param_refs = refs[:-1]
    n_layers = len(param_refs) // 2

    x = x_ref[...].astype(jnp.float32)
    for i in range(n_layers):  # static unroll at trace time
        w = param_refs[2 * i][...].astype(jnp.float32)
        b = param_refs[2 * i + 1][...].astype(jnp.float32)  # (1, Dout) broadcast
        y = jnp.dot(x, w, preferred_element_type=jnp.float32) + b
        y = _gelu(y)
        x = x + y if add_residual[i] else y
    o_ref[...] = x.astype(o_ref.dtype)


def _pick_tile_b(B):
    """Largest convenient batch tile that evenly divides B (full B for toy sizes)."""
    for t in (1024, 512, 256, 128):
        if B >= t and B % t == 0:
            return t
    return B


def _whole_block(i):
    # index_map for parameters: one resident block regardless of grid position.
    return (0, 0)


def _batch_block(i):
    # index_map for activations/outputs: tile along the batch axis only.
    return (i, 0)


def fused_forward(x, params, *, add_residual, out_dim):
    """Single pallas_call running the full 5-layer stack.

    params: list of (w: (Din, Dout) f32, b: (1, Dout) f32) — all resident in VMEM.
    """
    B, Din = x.shape
    tile_b = _pick_tile_b(B)

    flat_params = []
    in_specs = [pl.BlockSpec((tile_b, Din), _batch_block)]
    for w, b in params:
        din, dout = w.shape
        flat_params.append(w)
        flat_params.append(b)
        in_specs.append(pl.BlockSpec((din, dout), _whole_block))
        in_specs.append(pl.BlockSpec((1, dout), _whole_block))

    kernel = functools.partial(_fused_mlp_kernel, add_residual=tuple(add_residual))
    return pl.pallas_call(
        kernel,
        out_shape=jax.ShapeDtypeStruct((B, out_dim), x.dtype),
        grid=(B // tile_b,),
        in_specs=in_specs,
        out_specs=pl.BlockSpec((tile_b, out_dim), _batch_block),
        compiler_params=pltpu.CompilerParams(
            dimension_semantics=("parallel",),  # batch tiles shard across TCs
        ),
    )(x, *flat_params)


class ExampleDeepNeuralNetwork:
    """JAX/Pallas port of the PyTorch module (forward pass only)."""

    def __init__(self, layer_sizes, use_shortcut, key):
        assert len(layer_sizes) == 6
        self.use_shortcut = use_shortcut
        self.params = []
        self.add_residual = []
        for i in range(5):
            key, wk, bk = jax.random.split(key, 3)
            din, dout = layer_sizes[i], layer_sizes[i + 1]
            # deterministic init (roughly like torch's default uniform Linear init)
            bound = 1.0 / math.sqrt(din)
            w = jax.random.uniform(wk, (din, dout), jnp.float32, -bound, bound)
            b = jax.random.uniform(bk, (1, dout), jnp.float32, -bound, bound)
            self.params.append((w, b))
            self.add_residual.append(bool(use_shortcut and din == dout))

        # One jitted, fully-fused forward (static residual flags baked in).
        self._jit_forward = jax.jit(
            functools.partial(
                fused_forward,
                add_residual=tuple(self.add_residual),
                out_dim=layer_sizes[-1],
            )
        )

    def __call__(self, x):
        return self._jit_forward(x, self.params)


def _reference_forward(model, x):
    # pure-JAX reference for a silent correctness check
    for (w, b), add_res in zip(model.params, model.add_residual):
        y = _gelu(x @ w + b)
        x = x + y if add_res else y
    return x


if __name__ == "__main__":
    layer_sizes = [32, 32, 32, 32, 32, 16]  # last layer breaks the shortcut (shape mismatch)
    batch = 8

    key = jax.random.PRNGKey(0)
    key, xkey, pkey = jax.random.split(key, 3)
    x = jax.random.normal(xkey, (batch, layer_sizes[0]), jnp.float32)

    model = ExampleDeepNeuralNetwork(layer_sizes, use_shortcut=True, key=pkey)

    out = jax.block_until_ready(model(x))

    ref = _reference_forward(model, x)
    assert out.shape == (batch, layer_sizes[-1])
    assert jnp.allclose(out, ref, atol=1e-5, rtol=1e-5)

    print("KERNEL_OK")
</pallas_src>

<mosaic_0001>
module attributes {stable_mosaic.version = 11 : i64} {
  func.func @_fused_mlp_kernel(%arg0: i32, %arg1: memref<8x32xf32, #tpu.memory_space<vmem>>, %arg2: memref<32x32xf32, #tpu.memory_space<vmem>>, %arg3: memref<1x32xf32, #tpu.memory_space<vmem>>, %arg4: memref<32x32xf32, #tpu.memory_space<vmem>>, %arg5: memref<1x32xf32, #tpu.memory_space<vmem>>, %arg6: memref<32x32xf32, #tpu.memory_space<vmem>>, %arg7: memref<1x32xf32, #tpu.memory_space<vmem>>, %arg8: memref<32x32xf32, #tpu.memory_space<vmem>>, %arg9: memref<1x32xf32, #tpu.memory_space<vmem>>, %arg10: memref<32x16xf32, #tpu.memory_space<vmem>>, %arg11: memref<1x16xf32, #tpu.memory_space<vmem>>, %arg12: memref<8x16xf32, #tpu.memory_space<vmem>>) attributes {dimension_semantics = [#tpu.dimension_semantics<parallel>], iteration_bounds = array<i64: 1>, scalar_prefetch = 0 : i64, scratch_operands = 0 : i64, tpu.core_type = #tpu.core_type<tc>, window_params = [{transform_indices = @transform_0, window_bounds = array<i64: 8, 32>}, {pipeline_mode = #tpu.pipeline_mode<synchronous>, transform_indices = @transform_1, window_bounds = array<i64: 32, 32>}, {pipeline_mode = #tpu.pipeline_mode<synchronous>, transform_indices = @transform_2, window_bounds = array<i64: 1, 32>}, {pipeline_mode = #tpu.pipeline_mode<synchronous>, transform_indices = @transform_3, window_bounds = array<i64: 32, 32>}, {pipeline_mode = #tpu.pipeline_mode<synchronous>, transform_indices = @transform_4, window_bounds = array<i64: 1, 32>}, {pipeline_mode = #tpu.pipeline_mode<synchronous>, transform_indices = @transform_5, window_bounds = array<i64: 32, 32>}, {pipeline_mode = #tpu.pipeline_mode<synchronous>, transform_indices = @transform_6, window_bounds = array<i64: 1, 32>}, {pipeline_mode = #tpu.pipeline_mode<synchronous>, transform_indices = @transform_7, window_bounds = array<i64: 32, 32>}, {pipeline_mode = #tpu.pipeline_mode<synchronous>, transform_indices = @transform_8, window_bounds = array<i64: 1, 32>}, {pipeline_mode = #tpu.pipeline_mode<synchronous>, transform_indices = @transform_9, window_bounds = array<i64: 32, 16>}, {pipeline_mode = #tpu.pipeline_mode<synchronous>, transform_indices = @transform_10, window_bounds = array<i64: 1, 16>}, {transform_indices = @transform_11, window_bounds = array<i64: 8, 16>}]} {
    %c0 = arith.constant 0 : index
    %c0_0 = arith.constant 0 : index
    %0 = vector.load %arg1[%c0, %c0_0] : memref<8x32xf32, #tpu.memory_space<vmem>>, vector<8x32xf32>
    %c0_1 = arith.constant 0 : index
    %c0_2 = arith.constant 0 : index
    %1 = vector.load %arg2[%c0_1, %c0_2] : memref<32x32xf32, #tpu.memory_space<vmem>>, vector<32x32xf32>
    %c0_3 = arith.constant 0 : index
    %c0_4 = arith.constant 0 : index
    %2 = vector.load %arg3[%c0_3, %c0_4] : memref<1x32xf32, #tpu.memory_space<vmem>>, vector<1x32xf32>
    %cst = arith.constant dense<0.000000e+00> : vector<8x32xf32>
    %3 = tpu.matmul %0, %1, %cst {dimension_numbers = #tpu.dot_dimension_numbers<[1], [0], [0], [1], [0, 0, 1, 1], [], []>} : vector<8x32xf32>, vector<32x32xf32>, vector<8x32xf32> -> vector<8x32xf32>
    %4 = vector.broadcast %2 : vector<1x32xf32> to vector<8x32xf32>
    %5 = arith.addf %3, %4 : vector<8x32xf32>
    %cst_5 = arith.constant 5.000000e-01 : f32
    %6 = vector.broadcast %cst_5 : f32 to vector<8x32xf32>
    %7 = arith.mulf %6, %5 : vector<8x32xf32>
    %cst_6 = arith.constant 4.471500e-02 : f32
    %8 = vector.broadcast %cst_6 : f32 to vector<8x32xf32>
    %9 = arith.mulf %8, %5 : vector<8x32xf32>
    %10 = arith.mulf %9, %5 : vector<8x32xf32>
    %11 = arith.mulf %10, %5 : vector<8x32xf32>
    %12 = arith.addf %5, %11 : vector<8x32xf32>
    %cst_7 = arith.constant 0.797884583 : f32
    %13 = vector.broadcast %cst_7 : f32 to vector<8x32xf32>
    %14 = arith.mulf %13, %12 : vector<8x32xf32>
    %15 = math.tanh %14 : vector<8x32xf32>
    %cst_8 = arith.constant 1.000000e+00 : f32
    %16 = vector.broadcast %cst_8 : f32 to vector<8x32xf32>
    %17 = arith.addf %16, %15 : vector<8x32xf32>
    %18 = arith.mulf %7, %17 : vector<8x32xf32>
    %19 = arith.addf %0, %18 : vector<8x32xf32>
    %c0_9 = arith.constant 0 : index
    %c0_10 = arith.constant 0 : index
    %20 = vector.load %arg4[%c0_9, %c0_10] : memref<32x32xf32, #tpu.memory_space<vmem>>, vector<32x32xf32>
    %c0_11 = arith.constant 0 : index
    %c0_12 = arith.constant 0 : index
    %21 = vector.load %arg5[%c0_11, %c0_12] : memref<1x32xf32, #tpu.memory_space<vmem>>, vector<1x32xf32>
    %cst_13 = arith.constant dense<0.000000e+00> : vector<8x32xf32>
    %22 = tpu.matmul %19, %20, %cst_13 {dimension_numbers = #tpu.dot_dimension_numbers<[1], [0], [0], [1], [0, 0, 1, 1], [], []>} : vector<8x32xf32>, vector<32x32xf32>, vector<8x32xf32> -> vector<8x32xf32>
    %23 = vector.broadcast %21 : vector<1x32xf32> to vector<8x32xf32>
    %24 = arith.addf %22, %23 : vector<8x32xf32>
    %cst_14 = arith.constant 5.000000e-01 : f32
    %25 = vector.broadcast %cst_14 : f32 to vector<8x32xf32>
    %26 = arith.mulf %25, %24 : vector<8x32xf32>
    %cst_15 = arith.constant 4.471500e-02 : f32
    %27 = vector.broadcast %cst_15 : f32 to vector<8x32xf32>
    %28 = arith.mulf %27, %24 : vector<8x32xf32>
    %29 = arith.mulf %28, %24 : vector<8x32xf32>
    %30 = arith.mulf %29, %24 : vector<8x32xf32>
    %31 = arith.addf %24, %30 : vector<8x32xf32>
    %cst_16 = arith.constant 0.797884583 : f32
    %32 = vector.broadcast %cst_16 : f32 to vector<8x32xf32>
    %33 = arith.mulf %32, %31 : vector<8x32xf32>
    %34 = math.tanh %33 : vector<8x32xf32>
    %cst_17 = arith.constant 1.000000e+00 : f32
    %35 = vector.broadcast %cst_17 : f32 to vector<8x32xf32>
    %36 = arith.addf %35, %34 : vector<8x32xf32>
    %37 = arith.mulf %26, %36 : vector<8x32xf32>
    %38 = arith.addf %19, %37 : vector<8x32xf32>
    %c0_18 = arith.constant 0 : index
    %c0_19 = arith.constant 0 : index
    %39 = vector.load %arg6[%c0_18, %c0_19] : memref<32x32xf32, #tpu.memory_space<vmem>>, vector<32x32xf32>
    %c0_20 = arith.constant 0 : index
    %c0_21 = arith.constant 0 : index
    %40 = vector.load %arg7[%c0_20, %c0_21] : memref<1x32xf32, #tpu.memory_space<vmem>>, vector<1x32xf32>
    %cst_22 = arith.constant dense<0.000000e+00> : vector<8x32xf32>
    %41 = tpu.matmul %38, %39, %cst_22 {dimension_numbers = #tpu.dot_dimension_numbers<[1], [0], [0], [1], [0, 0, 1, 1], [], []>} : vector<8x32xf32>, vector<32x32xf32>, vector<8x32xf32> -> vector<8x32xf32>
    %42 = vector.broadcast %40 : vector<1x32xf32> to vector<8x32xf32>
    %43 = arith.addf %41, %42 : vector<8x32xf32>
    %cst_23 = arith.constant 5.000000e-01 : f32
    %44 = vector.broadcast %cst_23 : f32 to vector<8x32xf32>
    %45 = arith.mulf %44, %43 : vector<8x32xf32>
    %cst_24 = arith.constant 4.471500e-02 : f32
    %46 = vector.broadcast %cst_24 : f32 to vector<8x32xf32>
    %47 = arith.mulf %46, %43 : vector<8x32xf32>
    %48 = arith.mulf %47, %43 : vector<8x32xf32>
    %49 = arith.mulf %48, %43 : vector<8x32xf32>
    %50 = arith.addf %43, %49 : vector<8x32xf32>
    %cst_25 = arith.constant 0.797884583 : f32
    %51 = vector.broadcast %cst_25 : f32 to vector<8x32xf32>
    %52 = arith.mulf %51, %50 : vector<8x32xf32>
    %53 = math.tanh %52 : vector<8x32xf32>
    %cst_26 = arith.constant 1.000000e+00 : f32
    %54 = vector.broadcast %cst_26 : f32 to vector<8x32xf32>
    %55 = arith.addf %54, %53 : vector<8x32xf32>
    %56 = arith.mulf %45, %55 : vector<8x32xf32>
    %57 = arith.addf %38, %56 : vector<8x32xf32>
    %c0_27 = arith.constant 0 : index
    %c0_28 = arith.constant 0 : index
    %58 = vector.load %arg8[%c0_27, %c0_28] : memref<32x32xf32, #tpu.memory_space<vmem>>, vector<32x32xf32>
    %c0_29 = arith.constant 0 : index
    %c0_30 = arith.constant 0 : index
    %59 = vector.load %arg9[%c0_29, %c0_30] : memref<1x32xf32, #tpu.memory_space<vmem>>, vector<1x32xf32>
    %cst_31 = arith.constant dense<0.000000e+00> : vector<8x32xf32>
    %60 = tpu.matmul %57, %58, %cst_31 {dimension_numbers = #tpu.dot_dimension_numbers<[1], [0], [0], [1], [0, 0, 1, 1], [], []>} : vector<8x32xf32>, vector<32x32xf32>, vector<8x32xf32> -> vector<8x32xf32>
    %61 = vector.broadcast %59 : vector<1x32xf32> to vector<8x32xf32>
    %62 = arith.addf %60, %61 : vector<8x32xf32>
    %cst_32 = arith.constant 5.000000e-01 : f32
    %63 = vector.broadcast %cst_32 : f32 to vector<8x32xf32>
    %64 = arith.mulf %63, %62 : vector<8x32xf32>
    %cst_33 = arith.constant 4.471500e-02 : f32
    %65 = vector.broadcast %cst_33 : f32 to vector<8x32xf32>
    %66 = arith.mulf %65, %62 : vector<8x32xf32>
    %67 = arith.mulf %66, %62 : vector<8x32xf32>
    %68 = arith.mulf %67, %62 : vector<8x32xf32>
    %69 = arith.addf %62, %68 : vector<8x32xf32>
    %cst_34 = arith.constant 0.797884583 : f32
    %70 = vector.broadcast %cst_34 : f32 to vector<8x32xf32>
    %71 = arith.mulf %70, %69 : vector<8x32xf32>
    %72 = math.tanh %71 : vector<8x32xf32>
    %cst_35 = arith.constant 1.000000e+00 : f32
    %73 = vector.broadcast %cst_35 : f32 to vector<8x32xf32>
    %74 = arith.addf %73, %72 : vector<8x32xf32>
    %75 = arith.mulf %64, %74 : vector<8x32xf32>
    %76 = arith.addf %57, %75 : vector<8x32xf32>
    %c0_36 = arith.constant 0 : index
    %c0_37 = arith.constant 0 : index
    %77 = vector.load %arg10[%c0_36, %c0_37] : memref<32x16xf32, #tpu.memory_space<vmem>>, vector<32x16xf32>
    %c0_38 = arith.constant 0 : index
    %c0_39 = arith.constant 0 : index
    %78 = vector.load %arg11[%c0_38, %c0_39] : memref<1x16xf32, #tpu.memory_space<vmem>>, vector<1x16xf32>
    %cst_40 = arith.constant dense<0.000000e+00> : vector<8x16xf32>
    %79 = tpu.matmul %76, %77, %cst_40 {dimension_numbers = #tpu.dot_dimension_numbers<[1], [0], [0], [1], [0, 0, 1, 1], [], []>} : vector<8x32xf32>, vector<32x16xf32>, vector<8x16xf32> -> vector<8x16xf32>
    %80 = vector.broadcast %78 : vector<1x16xf32> to vector<8x16xf32>
    %81 = arith.addf %79, %80 : vector<8x16xf32>
    %cst_41 = arith.constant 5.000000e-01 : f32
    %82 = vector.broadcast %cst_41 : f32 to vector<8x16xf32>
    %83 = arith.mulf %82, %81 : vector<8x16xf32>
    %cst_42 = arith.constant 4.471500e-02 : f32
    %84 = vector.broadcast %cst_42 : f32 to vector<8x16xf32>
    %85 = arith.mulf %84, %81 : vector<8x16xf32>
    %86 = arith.mulf %85, %81 : vector<8x16xf32>
    %87 = arith.mulf %86, %81 : vector<8x16xf32>
    %88 = arith.addf %81, %87 : vector<8x16xf32>
    %cst_43 = arith.constant 0.797884583 : f32
    %89 = vector.broadcast %cst_43 : f32 to vector<8x16xf32>
    %90 = arith.mulf %89, %88 : vector<8x16xf32>
    %91 = math.tanh %90 : vector<8x16xf32>
    %cst_44 = arith.constant 1.000000e+00 : f32
    %92 = vector.broadcast %cst_44 : f32 to vector<8x16xf32>
    %93 = arith.addf %92, %91 : vector<8x16xf32>
    %94 = arith.mulf %83, %93 : vector<8x16xf32>
    %c0_45 = arith.constant 0 : index
    %c0_46 = arith.constant 0 : index
    %95 = vector.load %arg12[%c0_45, %c0_46] : memref<8x16xf32, #tpu.memory_space<vmem>>, vector<8x16xf32>
    tpu.vector_store %arg12[%c0_45, %c0_46], %94 {strides = array<i32>} : memref<8x16xf32, #tpu.memory_space<vmem>>, vector<8x16xf32>,
    return
  }
  func.func @transform_0(%arg0: i32) -> (i32, i32) {
    %c0_i32 = arith.constant 0 : i32
    %c0_i32_0 = arith.constant 0 : i32
    return %arg0, %c0_i32 : i32, i32
  }
  func.func @transform_1(%arg0: i32) -> (i32, i32) {
    %c0_i32 = arith.constant 0 : i32
    %c0_i32_0 = arith.constant 0 : i32
    %c0_i32_1 = arith.constant 0 : i32
    return %c0_i32, %c0_i32_0 : i32, i32
  }
  func.func @transform_2(%arg0: i32) -> (i32, i32) {
    %c0_i32 = arith.constant 0 : i32
    %c0_i32_0 = arith.constant 0 : i32
    %c0_i32_1 = arith.constant 0 : i32
    return %c0_i32, %c0_i32_0 : i32, i32
  }
  func.func @transform_3(%arg0: i32) -> (i32, i32) {
    %c0_i32 = arith.constant 0 : i32
    %c0_i32_0 = arith.constant 0 : i32
    %c0_i32_1 = arith.constant 0 : i32
    return %c0_i32, %c0_i32_0 : i32, i32
  }
  func.func @transform_4(%arg0: i32) -> (i32, i32) {
    %c0_i32 = arith.constant 0 : i32
    %c0_i32_0 = arith.constant 0 : i32
    %c0_i32_1 = arith.constant 0 : i32
    return %c0_i32, %c0_i32_0 : i32, i32
  }
  func.func @transform_5(%arg0: i32) -> (i32, i32) {
    %c0_i32 = arith.constant 0 : i32
    %c0_i32_0 = arith.constant 0 : i32
    %c0_i32_1 = arith.constant 0 : i32
    return %c0_i32, %c0_i32_0 : i32, i32
  }
  func.func @transform_6(%arg0: i32) -> (i32, i32) {
    %c0_i32 = arith.constant 0 : i32
    %c0_i32_0 = arith.constant 0 : i32
    %c0_i32_1 = arith.constant 0 : i32
    return %c0_i32, %c0_i32_0 : i32, i32
  }
  func.func @transform_7(%arg0: i32) -> (i32, i32) {
    %c0_i32 = arith.constant 0 : i32
    %c0_i32_0 = arith.constant 0 : i32
    %c0_i32_1 = arith.constant 0 : i32
    return %c0_i32, %c0_i32_0 : i32, i32
  }
  func.func @transform_8(%arg0: i32) -> (i32, i32) {
    %c0_i32 = arith.constant 0 : i32
    %c0_i32_0 = arith.constant 0 : i32
    %c0_i32_1 = arith.constant 0 : i32
    return %c0_i32, %c0_i32_0 : i32, i32
  }
  func.func @transform_9(%arg0: i32) -> (i32, i32) {
    %c0_i32 = arith.constant 0 : i32
    %c0_i32_0 = arith.constant 0 : i32
    %c0_i32_1 = arith.constant 0 : i32
    return %c0_i32, %c0_i32_0 : i32, i32
  }
  func.func @transform_10(%arg0: i32) -> (i32, i32) {
    %c0_i32 = arith.constant 0 : i32
    %c0_i32_0 = arith.constant 0 : i32
    %c0_i32_1 = arith.constant 0 : i32
    return %c0_i32, %c0_i32_0 : i32, i32
  }
  func.func @transform_11(%arg0: i32) -> (i32, i32) {
    %c0_i32 = arith.constant 0 : i32
    %c0_i32_0 = arith.constant 0 : i32
    return %arg0, %c0_i32 : i32, i32
  }
}

</mosaic_0001>

<llo_original>
// kernel: fused_forward.1
$region0: #{fused_forward.1}
  #allocation0 [shape = 'u32[]', space=smem, size = 0x4, offset = 0x4, fixed_abs, tag = 'smem constant byte address 0x4 - core index']
  #allocation1 [shape = 'u32[144,128]{1,0:T(1,128)}', space=vmem, size = 0x12000, scoped, tag = 'internal scratch']
  %s0 = inlined_call_operand.vmem [shape: f32[8,32], index: 0, kind: input, shape index: {}]
  %s1 = inlined_call_operand.vmem [shape: f32[32,32], index: 1, kind: input, shape index: {}]
  %s2 = inlined_call_operand.vmem [shape: f32[1,32], index: 2, kind: input, shape index: {}]
  %s3 = inlined_call_operand.hbm [shape: f32[32,32], index: 3, kind: input, shape index: {}]
  %s4 = inlined_call_operand.vmem [shape: f32[1,32], index: 4, kind: input, shape index: {}]
  %s5 = inlined_call_operand.hbm [shape: f32[32,32], index: 5, kind: input, shape index: {}]
  %s6 = inlined_call_operand.vmem [shape: f32[1,32], index: 6, kind: input, shape index: {}]
  %s7 = inlined_call_operand.hbm [shape: f32[32,32], index: 7, kind: input, shape index: {}]
  %s8 = inlined_call_operand.vmem [shape: f32[1,32], index: 8, kind: input, shape index: {}]
  %s9 = inlined_call_operand.vmem [shape: f32[32,16], index: 9, kind: input, shape index: {}]
  %s10 = inlined_call_operand.vmem [shape: f32[1,16], index: 10, kind: input, shape index: {}]
  %s11 = inlined_call_operand.hbm [shape: f32[8,16], index: 11, kind: output, shape index: {}]
  %s12 = sld [smem:[#allocation0]]
  $region66: #{fused_forward.1} parent=0
    _
  %s14 = ssub.s32 1, %s12
  %s15 = scalar_select 0, %s14, %s12
  $region1: #{fused_forward.1} parent=0
    #allocation2 [shape = 'u8[16384]{0}', space=vmem, size = 0x4000, scoped, tag = 'input window, operand 3, single buffered']
    #allocation3 [shape = 's32[1]{0}', space=sflag, size = 0x4, scoped, tag = 'scoped memory for fused_forward.1']
    #allocation4 [shape = 's32[1]{0}', space=sflag, size = 0x4, scoped, tag = 'scoped memory for fused_forward.1']
    #allocation5 [shape = 'u8[16384]{0}', space=vmem, size = 0x4000, scoped, tag = 'input window, operand 5, single buffered']
    #allocation6 [shape = 's32[1]{0}', space=sflag, size = 0x4, scoped, tag = 'scoped memory for fused_forward.1']
    #allocation7 [shape = 'u8[16384]{0}', space=vmem, size = 0x4000, scoped, tag = 'input window, operand 7, single buffered']
    #allocation8 [shape = 'u8[4096]{0}', space=vmem, size = 0x1000, scoped, tag = 'output window, operand 0, single buffered']
    %16 = vsyncpa [#allocation3], 0
    %17 = vsyncpa [#allocation6], 0
    %18 = vsyncpa [#allocation4], 0
    // Predicated region
    $region2: #{fused_forward.1} parent=1 // pred_check
      _
    $region3: #{fused_forward.1} parent=1 // pred_check_branch
      %20 = sbr.rel (0) target = $region5
    $region4: #{fused_forward.1} parent=1 // pred_region
      _
    $region5: #{fused_forward.1} parent=1 // pred_fallthru
      _
    // Predicated region
    $region6: #{fused_forward.1} parent=1 // pred_check
      _
    $region7: #{fused_forward.1} parent=1 // pred_check_branch
      %22 = sbr.rel (0) target = $region9
    $region8: #{fused_forward.1} parent=1 // pred_region
      _
    $region9: #{fused_forward.1} parent=1 // pred_fallthru
      _
    // Predicated region
    $region10: #{fused_forward.1} parent=1 // pred_check
      _
    $region11: #{fused_forward.1} parent=1 // pred_check_branch
      %24 = sbr.rel (0) target = $region13
    $region12: #{fused_forward.1} parent=1 // pred_region
      _
    $region13: #{fused_forward.1} parent=1 // pred_fallthru
      _
    // Predicated region
    $region14: #{fused_forward.1} parent=1 // pred_check
      _
    $region15: #{fused_forward.1} parent=1 // pred_check_branch
      %26 = sbr.rel (0) target = $region17
    $region16: #{fused_forward.1} parent=1 // pred_region
      %s28 = ssub.s32 512, 512
      %29 = vsyncadd [#allocation3], %s28
      %s30 = sshll.u32 [#allocation2], 4
      %s31 = int_to_ptr.vmem [resolvable:$true] %s30
      %36 = dma.hbm_to_vmem [thread:$0]  %s3, 512, %s31, [#allocation3], 128, 128, 8
    $region17: #{fused_forward.1} parent=1 // pred_fallthru
      _
    // Predicated region
    $region18: #{fused_forward.1} parent=1 // pred_check
      _
    $region19: #{fused_forward.1} parent=1 // pred_check_branch
      %38 = sbr.rel (0) target = $region21
    $region20: #{fused_forward.1} parent=1 // pred_region
      _
    $region21: #{fused_forward.1} parent=1 // pred_fallthru
      _
    // Predicated region
    $region22: #{fused_forward.1} parent=1 // pred_check
      _
    $region23: #{fused_forward.1} parent=1 // pred_check_branch
      %40 = sbr.rel (0) target = $region25
    $region24: #{fused_forward.1} parent=1 // pred_region
      %s42 = ssub.s32 512, 512
      %43 = vsyncadd [#allocation6], %s42
      %s44 = sshll.u32 [#allocation5], 4
      %s45 = int_to_ptr.vmem [resolvable:$true] %s44
      %50 = dma.hbm_to_vmem [thread:$0]  %s5, 512, %s45, [#allocation6], 128, 128, 8
    $region25: #{fused_forward.1} parent=1 // pred_fallthru
      _
    // Predicated region
    $region26: #{fused_forward.1} parent=1 // pred_check
      _
    $region27: #{fused_forward.1} parent=1 // pred_check_branch
      %52 = sbr.rel (0) target = $region29
    $region28: #{fused_forward.1} parent=1 // pred_region
      _
    $region29: #{fused_forward.1} parent=1 // pred_fallthru
      _
    // Predicated region
    $region30: #{fused_forward.1} parent=1 // pred_check
      _
    $region31: #{fused_forward.1} parent=1 // pred_check_branch
      %54 = sbr.rel (0) target = $region33
    $region32: #{fused_forward.1} parent=1 // pred_region
      %s56 = ssub.s32 512, 512
      %57 = vsyncadd [#allocation6], %s56
      %s58 = sshll.u32 [#allocation7], 4
      %s59 = int_to_ptr.vmem [resolvable:$true] %s58
      %64 = dma.hbm_to_vmem [thread:$0]  %s7, 512, %s59, [#allocation6], 128, 128, 8
    $region33: #{fused_forward.1} parent=1 // pred_fallthru
      _
    // Predicated region
    $region34: #{fused_forward.1} parent=1 // pred_check
      _
    $region35: #{fused_forward.1} parent=1 // pred_check_branch
      %66 = sbr.rel (0) target = $region37
    $region36: #{fused_forward.1} parent=1 // pred_region
      _
    $region37: #{fused_forward.1} parent=1 // pred_fallthru
      _
    // Predicated region
    $region38: #{fused_forward.1} parent=1 // pred_check
      _
    $region39: #{fused_forward.1} parent=1 // pred_check_branch
      %68 = sbr.rel (0) target = $region41
    $region40: #{fused_forward.1} parent=1 // pred_region
      _
    $region41: #{fused_forward.1} parent=1 // pred_fallthru
      _
    // Predicated region
    $region42: #{fused_forward.1} parent=1 // pred_check
      _
    $region43: #{fused_forward.1} parent=1 // pred_check_branch
      %70 = sbr.rel (0) target = $region45
    $region44: #{fused_forward.1} parent=1 // pred_region
      _
    $region45: #{fused_forward.1} parent=1 // pred_fallthru
      _
    // Predicated region
    $region46: #{fused_forward.1} parent=1 // pred_check
      _
    $region47: #{fused_forward.1} parent=1 // pred_check_branch
      %72 = sbr.rel (0) target = $region49
    $region48: #{fused_forward.1} parent=1 // pred_region
      %73 = dma.done [#allocation3], 512
    $region49: #{fused_forward.1} parent=1 // pred_fallthru
      _
    // Predicated region
    $region50: #{fused_forward.1} parent=1 // pred_check
      _
    $region51: #{fused_forward.1} parent=1 // pred_check_branch
      %75 = sbr.rel (0) target = $region53
    $region52: #{fused_forward.1} parent=1 // pred_region
      %76 = dma.done [#allocation6], 512
    $region53: #{fused_forward.1} parent=1 // pred_fallthru
      _
    // Predicated region
    $region54: #{fused_forward.1} parent=1 // pred_check
      _
    $region55: #{fused_forward.1} parent=1 // pred_check_branch
      %78 = sbr.rel (0) target = $region57
    $region56: #{fused_forward.1} parent=1 // pred_region
      %79 = dma.done [#allocation6], 512
    $region57: #{fused_forward.1} parent=1 // pred_fallthru
      _
    %v80 = vld [vmem:[%s0] sm:$0xff]
    %v81 = vld [vmem:[%s1] sm:$0xff]
    %v82 = vld [vmem:[%s1 + $0x8] sm:$0xff]
    %v83 = vld [vmem:[%s1 + $0x10] sm:$0xff]
    %v84 = vld [vmem:[%s1 + $0x18] sm:$0xff]
    %v85 = vld [vmem:[%s2] sm:$0x1]
    %v87 = vlaneseq
    %v88 = vshrl.u32 %v87, 7
    %v89 = vsub.s32 0, %v88
    %v90 = vrot.slane %v85, %v89
    %vm92 = vcmask 261120
    %v94 = vsel %vm92, %v80, 0
    %96 = vmatprep.subr.mxu0 0.0
    %97 = vmatpush1.msra.mxu0 0.0
    %98 = vmatprep.subr.mxu0 0.0
    %99 = vmatpush1.msra.mxu0 0.0
    %100 = vmatprep.subr.mxu0 0.0
    %101 = vmatpush1.msra.mxu0 0.0
    %102 = vmatprep.subr.mxu0 0.0
    %103 = vmatpush1.msra.mxu0 0.0
    %104 = vmatprep.subr.mxu0 0.0
    %105 = vmatpush1.msra.mxu0 0.0
    %106 = vmatprep.subr.mxu0 0.0
    %107 = vmatpush1.msra.mxu0 0.0
    %108 = vmatprep.subr.mxu0 0.0
    %109 = vmatpush1.msra.mxu0 0.0
    %110 = vmatprep.subr.mxu0 0.0
    %111 = vmatpush1.msra.mxu0 0.0
    %112 = vmatprep.subr.mxu0 0.0
    %113 = vmatpush1.msra.mxu0 0.0
    %114 = vmatprep.subr.mxu0 0.0
    %115 = vmatpush1.msra.mxu0 0.0
    %116 = vmatprep.subr.mxu0 0.0
    %117 = vmatpush1.msra.mxu0 0.0
    %118 = vmatprep.subr.mxu0 0.0
    %119 = vmatpush1.msra.mxu0 0.0
    %120 = vmatprep.subr.mxu0 0.0
    %121 = vmatpush1.msra.mxu0 %v84
    %122 = vmatprep.subr.mxu0 0.0
    %123 = vmatpush1.msra.mxu0 %v83
    %124 = vmatprep.subr.mxu0 0.0
    %125 = vmatpush1.msra.mxu0 %v82
    %126 = vmatprep.subr.mxu0 0.0
    %127 = vmatpush1.msra.mxu0 %v81
    %128 = vmatprep.subr.mxu0 0.0
    %129 = vmatpush2.msra.mxu0 0.0
    %130 = vmatprep.subr.mxu0 0.0
    %131 = vmatpush2.msra.mxu0 0.0
    %132 = vmatprep.subr.mxu0 0.0
    %133 = vmatpush2.msra.mxu0 0.0
    %134 = vmatprep.subr.mxu0 0.0
    %135 = vmatpush2.msra.mxu0 0.0
    %136 = vmatprep.subr.mxu0 0.0
    %137 = vmatpush2.msra.mxu0 0.0
    %138 = vmatprep.subr.mxu0 0.0
    %139 = vmatpush2.msra.mxu0 0.0
    %140 = vmatprep.subr.mxu0 0.0
    %141 = vmatpush2.msra.mxu0 0.0
    %142 = vmatprep.subr.mxu0 0.0
    %143 = vmatpush2.msra.mxu0 0.0
    %144 = vmatprep.subr.mxu0 0.0
    %145 = vmatpush2.msra.mxu0 0.0
    %146 = vmatprep.subr.mxu0 0.0
    %147 = vmatpush2.msra.mxu0 0.0
    %148 = vmatprep.subr.mxu0 0.0
    %149 = vmatpush2.msra.mxu0 0.0
    %150 = vmatprep.subr.mxu0 0.0
    %151 = vmatpush2.msra.mxu0 0.0
    %152 = vmatprep.subr.mxu0 0.0
    %153 = vmatpush2.msra.mxu0 0.0
    %154 = vmatprep.subr.mxu0 0.0
    %155 = vmatpush2.msra.mxu0 0.0
    %156 = vmatprep.subr.mxu0 0.0
    %157 = vmatpush2.msra.mxu0 0.0
    %158 = vmatprep.subr.mxu0 0.0
    %159 = vmatpush2.msra.mxu0 0.0
    %160 = vmatprep.mubr.f32.mxu0 0.0
    %161 = vmatmul.mubr.f32.gmra.mxu0 %v94
    %v162 = vpop.f32.mrf.mxu0
    %v163 = vadd.f32 %v90, %v162
    %v164 = vpop.f32.mrf.mxu0
    %165 = vdwg.mxu0
    %v166 = vmul.f32 %v163, 0.5
    %v167 = vmul.f32 %v163, 0.044715
    %v168 = vmul.f32 %v167, %v163
    %v169 = vmul.f32 %v168, %v163
    %v170 = vadd.f32 %v163, %v169
    %v171 = vmul.f32 %v170, 0.7978846
    %v172 = vtanh.pop %v171
    %v173 = vadd.f32 %v172, 1.0
    %v174 = vmul.f32 %v166, %v173
    %v175 = vadd.f32 %v80, %v174
    %v176 = vld [vmem:[#allocation2] sm:$0xff]
    %v177 = vld [vmem:[#allocation2 + $0x8] sm:$0xff]
    %v178 = vld [vmem:[#allocation2 + $0x10] sm:$0xff]
    %v179 = vld [vmem:[#allocation2 + $0x18] sm:$0xff]
    %v180 = vld [vmem:[%s4] sm:$0x1]
    %v182 = vlaneseq
    %v183 = vshrl.u32 %v182, 7
    %v184 = vsub.s32 0, %v183
    %v185 = vrot.slane %v180, %v184
    %v188 = vsel %vm92, %v175, 0
    %190 = vmatprep.subr.mxu0 0.0
    %191 = vmatpush1.msra.mxu0 0.0
    %192 = vmatprep.subr.mxu0 0.0
    %193 = vmatpush1.msra.mxu0 0.0
    %194 = vmatprep.subr.mxu0 0.0
    %195 = vmatpush1.msra.mxu0 0.0
    %196 = vmatprep.subr.mxu0 0.0
    %197 = vmatpush1.msra.mxu0 0.0
    %198 = vmatprep.subr.mxu0 0.0
    %199 = vmatpush1.msra.mxu0 0.0
    %200 = vmatprep.subr.mxu0 0.0
    %201 = vmatpush1.msra.mxu0 0.0
    %202 = vmatprep.subr.mxu0 0.0
    %203 = vmatpush1.msra.mxu0 0.0
    %204 = vmatprep.subr.mxu0 0.0
    %205 = vmatpush1.msra.mxu0 0.0
    %206 = vmatprep.subr.mxu0 0.0
    %207 = vmatpush1.msra.mxu0 0.0
    %208 = vmatprep.subr.mxu0 0.0
    %209 = vmatpush1.msra.mxu0 0.0
    %210 = vmatprep.subr.mxu0 0.0
    %211 = vmatpush1.msra.mxu0 0.0
    %212 = vmatprep.subr.mxu0 0.0
    %213 = vmatpush1.msra.mxu0 0.0
    %214 = vmatprep.subr.mxu0 0.0
    %215 = vmatpush1.msra.mxu0 %v179
    %216 = vmatprep.subr.mxu0 0.0
    %217 = vmatpush1.msra.mxu0 %v178
    %218 = vmatprep.subr.mxu0 0.0
    %219 = vmatpush1.msra.mxu0 %v177
    %220 = vmatprep.subr.mxu0 0.0
    %221 = vmatpush1.msra.mxu0 %v176
    %222 = vmatprep.subr.mxu0 0.0
    %223 = vmatpush2.msra.mxu0 0.0
    %224 = vmatprep.subr.mxu0 0.0
    %225 = vmatpush2.msra.mxu0 0.0
    %226 = vmatprep.subr.mxu0 0.0
    %227 = vmatpush2.msra.mxu0 0.0
    %228 = vmatprep.subr.mxu0 0.0
    %229 = vmatpush2.msra.mxu0 0.0
    %230 = vmatprep.subr.mxu0 0.0
    %231 = vmatpush2.msra.mxu0 0.0
    %232 = vmatprep.subr.mxu0 0.0
    %233 = vmatpush2.msra.mxu0 0.0
    %234 = vmatprep.subr.mxu0 0.0
    %235 = vmatpush2.msra.mxu0 0.0
    %236 = vmatprep.subr.mxu0 0.0
    %237 = vmatpush2.msra.mxu0 0.0
    %238 = vmatprep.subr.mxu0 0.0
    %239 = vmatpush2.msra.mxu0 0.0
    %240 = vmatprep.subr.mxu0 0.0
    %241 = vmatpush2.msra.mxu0 0.0
    %242 = vmatprep.subr.mxu0 0.0
    %243 = vmatpush2.msra.mxu0 0.0
    %244 = vmatprep.subr.mxu0 0.0
    %245 = vmatpush2.msra.mxu0 0.0
    %246 = vmatprep.subr.mxu0 0.0
    %247 = vmatpush2.msra.mxu0 0.0
    %248 = vmatprep.subr.mxu0 0.0
    %249 = vmatpush2.msra.mxu0 0.0
    %250 = vmatprep.subr.mxu0 0.0
    %251 = vmatpush2.msra.mxu0 0.0
    %252 = vmatprep.subr.mxu0 0.0
    %253 = vmatpush2.msra.mxu0 0.0
    %254 = vmatprep.mubr.f32.mxu0 0.0
    %255 = vmatmul.mubr.f32.gmra.mxu0 %v188
    %v256 = vpop.f32.mrf.mxu0
    %v257 = vadd.f32 %v185, %v256
    %v258 = vpop.f32.mrf.mxu0
    %259 = vdwg.mxu0
    %v260 = vmul.f32 %v257, 0.5
    %v261 = vmul.f32 %v257, 0.044715
    %v262 = vmul.f32 %v261, %v257
    %v263 = vmul.f32 %v262, %v257
    %v264 = vadd.f32 %v257, %v263
    %v265 = vmul.f32 %v264, 0.7978846
    %v266 = vtanh.pop %v265
    %v267 = vadd.f32 %v266, 1.0
    %v268 = vmul.f32 %v260, %v267
    %v269 = vadd.f32 %v175, %v268
    %v270 = vld [vmem:[#allocation5] sm:$0xff]
    %v271 = vld [vmem:[#allocation5 + $0x8] sm:$0xff]
    %v272 = vld [vmem:[#allocation5 + $0x10] sm:$0xff]
    %v273 = vld [vmem:[#allocation5 + $0x18] sm:$0xff]
    %v274 = vld [vmem:[%s6] sm:$0x1]
    %v276 = vlaneseq
    %v277 = vshrl.u32 %v276, 7
    %v278 = vsub.s32 0, %v277
    %v279 = vrot.slane %v274, %v278
    %v282 = vsel %vm92, %v269, 0
    %284 = vmatprep.subr.mxu0 0.0
    %285 = vmatpush1.msra.mxu0 0.0
    %286 = vmatprep.subr.mxu0 0.0
    %287 = vmatpush1.msra.mxu0 0.0
    %288 = vmatprep.subr.mxu0 0.0
    %289 = vmatpush1.msra.mxu0 0.0
    %290 = vmatprep.subr.mxu0 0.0
    %291 = vmatpush1.msra.mxu0 0.0
    %292 = vmatprep.subr.mxu0 0.0
    %293 = vmatpush1.msra.mxu0 0.0
    %294 = vmatprep.subr.mxu0 0.0
    %295 = vmatpush1.msra.mxu0 0.0
    %296 = vmatprep.subr.mxu0 0.0
    %297 = vmatpush1.msra.mxu0 0.0
    %298 = vmatprep.subr.mxu0 0.0
    %299 = vmatpush1.msra.mxu0 0.0
    %300 = vmatprep.subr.mxu0 0.0
    %301 = vmatpush1.msra.mxu0 0.0
    %302 = vmatprep.subr.mxu0 0.0
    %303 = vmatpush1.msra.mxu0 0.0
    %304 = vmatprep.subr.mxu0 0.0
    %305 = vmatpush1.msra.mxu0 0.0
    %306 = vmatprep.subr.mxu0 0.0
    %307 = vmatpush1.msra.mxu0 0.0
    %308 = vmatprep.subr.mxu0 0.0
    %309 = vmatpush1.msra.mxu0 %v273
    %310 = vmatprep.subr.mxu0 0.0
    %311 = vmatpush1.msra.mxu0 %v272
    %312 = vmatprep.subr.mxu0 0.0
    %313 = vmatpush1.msra.mxu0 %v271
    %314 = vmatprep.subr.mxu0 0.0
    %315 = vmatpush1.msra.mxu0 %v270
    %316 = vmatprep.subr.mxu0 0.0
    %317 = vmatpush2.msra.mxu0 0.0
    %318 = vmatprep.subr.mxu0 0.0
    %319 = vmatpush2.msra.mxu0 0.0
    %320 = vmatprep.subr.mxu0 0.0
    %321 = vmatpush2.msra.mxu0 0.0
    %322 = vmatprep.subr.mxu0 0.0
    %323 = vmatpush2.msra.mxu0 0.0
    %324 = vmatprep.subr.mxu0 0.0
    %325 = vmatpush2.msra.mxu0 0.0
    %326 = vmatprep.subr.mxu0 0.0
    %327 = vmatpush2.msra.mxu0 0.0
    %328 = vmatprep.subr.mxu0 0.0
    %329 = vmatpush2.msra.mxu0 0.0
    %330 = vmatprep.subr.mxu0 0.0
    %331 = vmatpush2.msra.mxu0 0.0
    %332 = vmatprep.subr.mxu0 0.0
    %333 = vmatpush2.msra.mxu0 0.0
    %334 = vmatprep.subr.mxu0 0.0
    %335 = vmatpush2.msra.mxu0 0.0
    %336 = vmatprep.subr.mxu0 0.0
    %337 = vmatpush2.msra.mxu0 0.0
    %338 = vmatprep.subr.mxu0 0.0
    %339 = vmatpush2.msra.mxu0 0.0
    %340 = vmatprep.subr.mxu0 0.0
    %341 = vmatpush2.msra.mxu0 0.0
    %342 = vmatprep.subr.mxu0 0.0
    %343 = vmatpush2.msra.mxu0 0.0
    %344 = vmatprep.subr.mxu0 0.0
    %345 = vmatpush2.msra.mxu0 0.0
    %346 = vmatprep.subr.mxu0 0.0
    %347 = vmatpush2.msra.mxu0 0.0
    %348 = vmatprep.mubr.f32.mxu0 0.0
    %349 = vmatmul.mubr.f32.gmra.mxu0 %v282
    %v350 = vpop.f32.mrf.mxu0
    %v351 = vadd.f32 %v279, %v350
    %v352 = vpop.f32.mrf.mxu0
    %353 = vdwg.mxu0
    %v354 = vmul.f32 %v351, 0.5
    %v355 = vmul.f32 %v351, 0.044715
    %v356 = vmul.f32 %v355, %v351
    %v357 = vmul.f32 %v356, %v351
    %v358 = vadd.f32 %v351, %v357
    %v359 = vmul.f32 %v358, 0.7978846
    %v360 = vtanh.pop %v359
    %v361 = vadd.f32 %v360, 1.0
    %v362 = vmul.f32 %v354, %v361
    %v363 = vadd.f32 %v269, %v362
    %v364 = vld [vmem:[#allocation7] sm:$0xff]
    %v365 = vld [vmem:[#allocation7 + $0x8] sm:$0xff]
    %v366 = vld [vmem:[#allocation7 + $0x10] sm:$0xff]
    %v367 = vld [vmem:[#allocation7 + $0x18] sm:$0xff]
    %v368 = vld [vmem:[%s8] sm:$0x1]
    %v370 = vlaneseq
    %v371 = vshrl.u32 %v370, 7
    %v372 = vsub.s32 0, %v371
    %v373 = vrot.slane %v368, %v372
    %v376 = vsel %vm92, %v363, 0
    %378 = vmatprep.subr.mxu0 0.0
    %379 = vmatpush1.msra.mxu0 0.0
    %380 = vmatprep.subr.mxu0 0.0
    %381 = vmatpush1.msra.mxu0 0.0
    %382 = vmatprep.subr.mxu0 0.0
    %383 = vmatpush1.msra.mxu0 0.0
    %384 = vmatprep.subr.mxu0 0.0
    %385 = vmatpush1.msra.mxu0 0.0
    %386 = vmatprep.subr.mxu0 0.0
    %387 = vmatpush1.msra.mxu0 0.0
    %388 = vmatprep.subr.mxu0 0.0
    %389 = vmatpush1.msra.mxu0 0.0
    %390 = vmatprep.subr.mxu0 0.0
    %391 = vmatpush1.msra.mxu0 0.0
    %392 = vmatprep.subr.mxu0 0.0
    %393 = vmatpush1.msra.mxu0 0.0
    %394 = vmatprep.subr.mxu0 0.0
    %395 = vmatpush1.msra.mxu0 0.0
    %396 = vmatprep.subr.mxu0 0.0
    %397 = vmatpush1.msra.mxu0 0.0
    %398 = vmatprep.subr.mxu0 0.0
    %399 = vmatpush1.msra.mxu0 0.0
    %400 = vmatprep.subr.mxu0 0.0
    %401 = vmatpush1.msra.mxu0 0.0
    %402 = vmatprep.subr.mxu0 0.0
    %403 = vmatpush1.msra.mxu0 %v367
    %404 = vmatprep.subr.mxu0 0.0
    %405 = vmatpush1.msra.mxu0 %v366
    %406 = vmatprep.subr.mxu0 0.0
    %407 = vmatpush1.msra.mxu0 %v365
    %408 = vmatprep.subr.mxu0 0.0
    %409 = vmatpush1.msra.mxu0 %v364
    %410 = vmatprep.subr.mxu0 0.0
    %411 = vmatpush2.msra.mxu0 0.0
    %412 = vmatprep.subr.mxu0 0.0
    %413 = vmatpush2.msra.mxu0 0.0
    %414 = vmatprep.subr.mxu0 0.0
    %415 = vmatpush2.msra.mxu0 0.0
    %416 = vmatprep.subr.mxu0 0.0
    %417 = vmatpush2.msra.mxu0 0.0
    %418 = vmatprep.subr.mxu0 0.0
    %419 = vmatpush2.msra.mxu0 0.0
    %420 = vmatprep.subr.mxu0 0.0
    %421 = vmatpush2.msra.mxu0 0.0
    %422 = vmatprep.subr.mxu0 0.0
    %423 = vmatpush2.msra.mxu0 0.0
    %424 = vmatprep.subr.mxu0 0.0
    %425 = vmatpush2.msra.mxu0 0.0
    %426 = vmatprep.subr.mxu0 0.0
    %427 = vmatpush2.msra.mxu0 0.0
    %428 = vmatprep.subr.mxu0 0.0
    %429 = vmatpush2.msra.mxu0 0.0
    %430 = vmatprep.subr.mxu0 0.0
    %431 = vmatpush2.msra.mxu0 0.0
    %432 = vmatprep.subr.mxu0 0.0
    %433 = vmatpush2.msra.mxu0 0.0
    %434 = vmatprep.subr.mxu0 0.0
    %435 = vmatpush2.msra.mxu0 0.0
    %436 = vmatprep.subr.mxu0 0.0
    %437 = vmatpush2.msra.mxu0 0.0
    %438 = vmatprep.subr.mxu0 0.0
    %439 = vmatpush2.msra.mxu0 0.0
    %440 = vmatprep.subr.mxu0 0.0
    %441 = vmatpush2.msra.mxu0 0.0
    %442 = vmatprep.mubr.f32.mxu0 0.0
    %443 = vmatmul.mubr.f32.gmra.mxu0 %v376
    %v444 = vpop.f32.mrf.mxu0
    %v445 = vadd.f32 %v373, %v444
    %v446 = vpop.f32.mrf.mxu0
    %447 = vdwg.mxu0
    %v448 = vmul.f32 %v445, 0.5
    %v449 = vmul.f32 %v445, 0.044715
    %v450 = vmul.f32 %v449, %v445
    %v451 = vmul.f32 %v450, %v445
    %v452 = vadd.f32 %v445, %v451
    %v453 = vmul.f32 %v452, 0.7978846
    %v454 = vtanh.pop %v453
    %v455 = vadd.f32 %v454, 1.0
    %v456 = vmul.f32 %v448, %v455
    %v457 = vadd.f32 %v363, %v456
    %v458 = vld [vmem:[%s9] sm:$0xff]
    %v459 = vld [vmem:[%s9 + $0x8] sm:$0xff]
    %v460 = vld [vmem:[%s9 + $0x10] sm:$0xff]
    %v461 = vld [vmem:[%s9 + $0x18] sm:$0xff]
    %v462 = vld [vmem:[%s10] sm:$0x1]
    %v464 = vlaneseq
    %v465 = vshrl.u32 %v464, 7
    %v466 = vsub.s32 0, %v465
    %v467 = vrot.slane %v462, %v466
    %v470 = vsel %vm92, %v457, 0
    %472 = vmatprep.subr.mxu0 0.0
    %473 = vmatpush1.msra.mxu0 0.0
    %474 = vmatprep.subr.mxu0 0.0
    %475 = vmatpush1.msra.mxu0 0.0
    %476 = vmatprep.subr.mxu0 0.0
    %477 = vmatpush1.msra.mxu0 0.0
    %478 = vmatprep.subr.mxu0 0.0
    %479 = vmatpush1.msra.mxu0 0.0
    %480 = vmatprep.subr.mxu0 0.0
    %481 = vmatpush1.msra.mxu0 0.0
    %482 = vmatprep.subr.mxu0 0.0
    %483 = vmatpush1.msra.mxu0 0.0
    %484 = vmatprep.subr.mxu0 0.0
    %485 = vmatpush1.msra.mxu0 0.0
    %486 = vmatprep.subr.mxu0 0.0
    %487 = vmatpush1.msra.mxu0 0.0
    %488 = vmatprep.subr.mxu0 0.0
    %489 = vmatpush1.msra.mxu0 0.0
    %490 = vmatprep.subr.mxu0 0.0
    %491 = vmatpush1.msra.mxu0 0.0
    %492 = vmatprep.subr.mxu0 0.0
    %493 = vmatpush1.msra.mxu0 0.0
    %494 = vmatprep.subr.mxu0 0.0
    %495 = vmatpush1.msra.mxu0 0.0
    %496 = vmatprep.subr.mxu0 0.0
    %497 = vmatpush1.msra.mxu0 %v461
    %498 = vmatprep.subr.mxu0 0.0
    %499 = vmatpush1.msra.mxu0 %v460
    %500 = vmatprep.subr.mxu0 0.0
    %501 = vmatpush1.msra.mxu0 %v459
    %502 = vmatprep.subr.mxu0 0.0
    %503 = vmatpush1.msra.mxu0 %v458
    %504 = vmatprep.subr.mxu0 0.0
    %505 = vmatpush2.msra.mxu0 0.0
    %506 = vmatprep.subr.mxu0 0.0
    %507 = vmatpush2.msra.mxu0 0.0
    %508 = vmatprep.subr.mxu0 0.0
    %509 = vmatpush2.msra.mxu0 0.0
    %510 = vmatprep.subr.mxu0 0.0
    %511 = vmatpush2.msra.mxu0 0.0
    %512 = vmatprep.subr.mxu0 0.0
    %513 = vmatpush2.msra.mxu0 0.0
    %514 = vmatprep.subr.mxu0 0.0
    %515 = vmatpush2.msra.mxu0 0.0
    %516 = vmatprep.subr.mxu0 0.0
    %517 = vmatpush2.msra.mxu0 0.0
    %518 = vmatprep.subr.mxu0 0.0
    %519 = vmatpush2.msra.mxu0 0.0
    %520 = vmatprep.subr.mxu0 0.0
    %521 = vmatpush2.msra.mxu0 0.0
    %522 = vmatprep.subr.mxu0 0.0
    %523 = vmatpush2.msra.mxu0 0.0
    %524 = vmatprep.subr.mxu0 0.0
    %525 = vmatpush2.msra.mxu0 0.0
    %526 = vmatprep.subr.mxu0 0.0
    %527 = vmatpush2.msra.mxu0 0.0
    %528 = vmatprep.subr.mxu0 0.0
    %529 = vmatpush2.msra.mxu0 0.0
    %530 = vmatprep.subr.mxu0 0.0
    %531 = vmatpush2.msra.mxu0 0.0
    %532 = vmatprep.subr.mxu0 0.0
    %533 = vmatpush2.msra.mxu0 0.0
    %534 = vmatprep.subr.mxu0 0.0
    %535 = vmatpush2.msra.mxu0 0.0
    %536 = vmatprep.mubr.f32.mxu0 0.0
    %537 = vmatmul.mubr.f32.gmra.mxu0 %v470
    %v538 = vpop.f32.mrf.mxu0
    %v539 = vadd.f32 %v467, %v538
    %v540 = vpop.f32.mrf.mxu0
    %541 = vdwg.mxu0
    %v542 = vmul.f32 %v539, 0.5
    %v543 = vmul.f32 %v539, 0.044715
    %v544 = vmul.f32 %v543, %v539
    %v545 = vmul.f32 %v544, %v539
    %v546 = vadd.f32 %v539, %v545
    %v547 = vmul.f32 %v546, 0.7978846
    %v548 = vtanh.pop %v547
    %v549 = vadd.f32 %v548, 1.0
    %v550 = vmul.f32 %v542, %v549
    %vm551 = vcmask 130048
    %552 = vst.msk [vmem:[#allocation8] sm:$0xff] %vm551, %v550
    // Predicated region
    $region58: #{fused_forward.1} parent=1 // pred_check
      _
    $region59: #{fused_forward.1} parent=1 // pred_check_branch
      %554 = sbr.rel (0) target = $region61
    $region60: #{fused_forward.1} parent=1 // pred_region
      %s556 = ssub.s32 128, 128
      %557 = vsyncadd [#allocation4], %s556
      %s559 = sshll.u32 [#allocation8], 4
      %s560 = int_to_ptr.vmem [resolvable:$true] %s559
      %562 = dma.vmem_to_hbm [thread:$0]  %s560, 128, %s11, [#allocation4]
    $region61: #{fused_forward.1} parent=1 // pred_fallthru
      _
    // Predicated region
    $region62: #{fused_forward.1} parent=1 // pred_check
      _
    $region63: #{fused_forward.1} parent=1 // pred_check_branch
      %564 = sbr.rel (0) target = $region65
    $region64: #{fused_forward.1} parent=1 // pred_region
      %565 = dma.done [#allocation4], 128
    $region65: #{fused_forward.1} parent=1 // pred_fallthru
      _
    %566 = vsyncpa [#allocation3], 1
    %567 = vsyncpa [#allocation6], 1
    %568 = vsyncpa [#allocation4], 1

</llo_original>
